<compile_context>
chip_gen: v5e
topology: v5e:2x2
jax: 0.10.0
libtpu: 0.0.40
codegen_flags: <defaults>
</compile_context>

<pallas_src>
import math

import jax
import jax.numpy as jnp
from jax.experimental import pallas as pl
from jax.experimental.pallas import tpu as pltpu


def _make_mha_kernel(num_heads: int, head_dim: int, embed_dim: int):
    inv_heads = 1.0 / float(num_heads)
    E = embed_dim
    hd = head_dim

    def kernel(x_ref, wqkv_ref, wo_ref, bqkv_ref, bo_ref,
               out_ref, attnw_ref, ctx_sc):
        x = x_ref[0]                                            # (T, E) bf16

        # Fused QKV projection: one N=3E MXU matmul, f32 accumulate, bias in f32.
        # (scaling already folded into the Q section of wqkv / bqkv)
        qkv = (jnp.dot(x, wqkv_ref[...], preferred_element_type=jnp.float32)
               + bqkv_ref[...]).astype(jnp.bfloat16)            # (T, 3E)

        attnw_acc = None
        for h in range(num_heads):                              # static unroll
            q = qkv[:, h * hd:(h + 1) * hd]                     # (T, hd) bf16
            k = qkv[:, E + h * hd:E + (h + 1) * hd]             # (S, hd) bf16
            v = qkv[:, 2 * E + h * hd:2 * E + (h + 1) * hd]     # (S, hd) bf16

            # q @ k^T without an explicit transpose (contract last dims on MXU).
            s = jax.lax.dot_general(q, k, (((1,), (1,)), ((), ())),
                                    preferred_element_type=jnp.float32)  # (T, S)

            # Numerically stable softmax over keys (f32, matches F.softmax(float)).
            s = s - jnp.max(s, axis=-1, keepdims=True)
            e = jnp.exp(s)
            denom = jnp.sum(e, axis=-1, keepdims=True)
            r = pl.reciprocal(denom, approx=True)
            r = r * (2.0 - denom * r)        # one Newton step -> ~exact 1/denom
            p = e * r                                            # (T, S) f32

            o = jnp.dot(p.astype(jnp.bfloat16), v,
                        preferred_element_type=jnp.float32)      # (T, hd) f32

            # Assemble per-head contexts into a (T, E) slab for one fused out-proj.
            ctx_sc[:, h * hd:(h + 1) * hd] = o.astype(jnp.bfloat16)

            attnw_acc = p if attnw_acc is None else attnw_acc + p

        # Single fused output projection (K = E) + bias, written once.
        out_ref[0] = (jnp.dot(ctx_sc[...], wo_ref[...],
                              preferred_element_type=jnp.float32)
                      + bo_ref[...])
        # Head-mean attention weights: scale once, single lane-dense store.
        attnw_ref[0] = attnw_acc * inv_heads

    return kernel


def multihead_attention_pallas(query, wq, wk, wv, wo, bq, bv, bo,
                               num_heads: int, d_tilde: float = 1.0):
    """query: (tgt_len, bsz, embed_dim) float32.  Weights (E, E) as (in, out).

    Returns:
      attn         : (tgt_len, bsz, embed_dim) float32
      attn_weights : (bsz, tgt_len, src_len)   float32  -- mean over heads
    """
    tgt_len, bsz, embed_dim = query.shape
    head_dim = embed_dim // num_heads
    assert head_dim * num_heads == embed_dim
    scaling = (head_dim / d_tilde) ** 0.5 / head_dim
    src_len = tgt_len

    # (T, B, E) -> (B, T, E), bf16 at the boundary (halves x DMA / VMEM bytes).
    x = jnp.transpose(query, (1, 0, 2)).astype(jnp.bfloat16)

    # Fused [Q | K | V] weight, (in, out) layout; columns of each section are
    # already head-major (head h = cols [h*hd, (h+1)*hd)).  Fold scaling into Q.
    wqkv = jnp.concatenate(
        [wq * scaling, wk, wv], axis=1).astype(jnp.bfloat16)          # (E, 3E)
    bqkv = jnp.concatenate(
        [bq * scaling, jnp.zeros_like(bq), bv]                        # k_proj: no bias
    ).reshape(1, 3 * embed_dim).astype(jnp.float32)
    wo_b = wo.astype(jnp.bfloat16)                                    # (E, E)
    bo_2 = bo.reshape(1, embed_dim).astype(jnp.float32)

    kernel = _make_mha_kernel(num_heads, head_dim, embed_dim)

    # Advisory cost estimate for the XLA scheduler.
    flops = bsz * (
        2 * tgt_len * embed_dim * (3 * embed_dim)                     # fused qkv proj
        + num_heads * (2 * 2 * tgt_len * src_len * head_dim)          # qk^T + pv
        + 2 * tgt_len * embed_dim * embed_dim)                        # fused out proj
    transcendentals = bsz * num_heads * tgt_len * src_len
    bytes_accessed = (bsz * tgt_len * embed_dim * 2                   # x bf16
                      + 4 * embed_dim * embed_dim * 2                 # fused weights bf16
                      + 4 * embed_dim * 4                             # biases f32
                      + bsz * tgt_len * embed_dim * 4                 # attn out f32
                      + bsz * tgt_len * src_len * 4)                  # head-mean weights f32

    out, attn_w = pl.pallas_call(
        kernel,
        out_shape=(
            jax.ShapeDtypeStruct((bsz, tgt_len, embed_dim), jnp.float32),
            jax.ShapeDtypeStruct((bsz, tgt_len, src_len), jnp.float32),
        ),
        grid_spec=pltpu.PrefetchScalarGridSpec(
            num_scalar_prefetch=0,
            grid=(bsz,),
            in_specs=[
                # x: one (T, E) block per batch element
                pl.BlockSpec((1, tgt_len, embed_dim), lambda b: (b, 0, 0)),
                # weights / biases: constant index_map -> DMA'd once, grid-resident
                pl.BlockSpec((embed_dim, 3 * embed_dim), lambda b: (0, 0)),
                pl.BlockSpec((embed_dim, embed_dim), lambda b: (0, 0)),
                pl.BlockSpec((1, 3 * embed_dim), lambda b: (0, 0)),
                pl.BlockSpec((1, embed_dim), lambda b: (0, 0)),
            ],
            out_specs=[
                pl.BlockSpec((1, tgt_len, embed_dim), lambda b: (b, 0, 0)),
                pl.BlockSpec((1, tgt_len, src_len), lambda b: (b, 0, 0)),
            ],
            scratch_shapes=[
                pltpu.VMEM((tgt_len, embed_dim), jnp.bfloat16),       # per-head ctx slab
            ],
        ),
        compiler_params=pltpu.CompilerParams(
            dimension_semantics=("parallel",),
            vmem_limit_bytes=64 * 1024 * 1024),
        cost_estimate=pl.CostEstimate(flops=flops,
                                      transcendentals=transcendentals,
                                      bytes_accessed=bytes_accessed),
    )(x, wqkv, wo_b, bqkv, bo_2)

    # (B, T, E) -> (T, B, E)  (module output layout).
    attn = jnp.transpose(out, (1, 0, 2))
    return attn, attn_w


def _xavier_uniform(key, shape, gain):
    fan_in, fan_out = shape
    bound = gain * math.sqrt(6.0 / (fan_in + fan_out))
    return jax.random.uniform(key, shape, jnp.float32, -bound, bound)


def _reference(query, wq, wk, wv, wo, bq, bv, bo, num_heads, d_tilde=1.0):
    """Pure-JAX f32 reference mirroring the PyTorch forward."""
    T, B, E = query.shape
    hd = E // num_heads
    scaling = (hd / d_tilde) ** 0.5 / hd
    q = (query @ wq + bq) * scaling
    k = query @ wk
    v = query @ wv + bv

    def split(t):
        return jnp.transpose(t.reshape(T, B * num_heads, hd), (1, 0, 2))

    qh, kh, vh = split(q), split(k), split(v)
    w = jnp.einsum('btd,bsd->bts', qh, kh)
    w = jax.nn.softmax(w.astype(jnp.float32), axis=-1)
    a = jnp.einsum('bts,bsd->btd', w, vh)
    a = jnp.transpose(a, (1, 0, 2)).reshape(T, B, E)
    out = a @ wo + bo
    attn_w = jnp.mean(w.reshape(B, num_heads, T, T), axis=1)
    return out, attn_w


if __name__ == "__main__":
    # Small shapes consistent with the module: seq=8, batch=2, embed=32, heads=4.
    tgt_len, bsz, embed_dim, num_heads = 8, 2, 32, 4
    d_tilde = 1.0

    key = jax.random.PRNGKey(0)
    kx, kq, kk, kv, ko, kbq, kbv = jax.random.split(key, 7)

    query = jax.random.normal(kx, (tgt_len, bsz, embed_dim), jnp.float32)

    # reset_parameters(): xavier_uniform gain=1/sqrt(2*d_tilde) for q/k/v,
    # gain=1/sqrt(d_tilde) for out_proj; out_proj bias = 0. (Stored as (in, out).)
    g_qkv = 1.0 / math.sqrt(2 * d_tilde)
    g_out = 1.0 / math.sqrt(d_tilde)
    wq = _xavier_uniform(kq, (embed_dim, embed_dim), g_qkv)
    wk = _xavier_uniform(kk, (embed_dim, embed_dim), g_qkv)
    wv = _xavier_uniform(kv, (embed_dim, embed_dim), g_qkv)
    wo = _xavier_uniform(ko, (embed_dim, embed_dim), g_out)
    # nn.Linear default bias init: U(-1/sqrt(fan_in), 1/sqrt(fan_in))
    b_bound = 1.0 / math.sqrt(embed_dim)
    bq = jax.random.uniform(kbq, (embed_dim,), jnp.float32, -b_bound, b_bound)
    bv = jax.random.uniform(kbv, (embed_dim,), jnp.float32, -b_bound, b_bound)
    bo = jnp.zeros((embed_dim,), jnp.float32)

    attn, attn_weights = multihead_attention_pallas(
        query, wq, wk, wv, wo, bq, bv, bo, num_heads=num_heads, d_tilde=d_tilde)
    attn = jax.block_until_ready(attn)
    attn_weights = jax.block_until_ready(attn_weights)

    ref_attn, ref_w = _reference(query, wq, wk, wv, wo, bq, bv, bo,
                                 num_heads=num_heads, d_tilde=d_tilde)

    assert attn.shape == (tgt_len, bsz, embed_dim)
    assert attn_weights.shape == (bsz, tgt_len, tgt_len)
    # bf16 MXU operands -> compare against the f32 reference with loosened tolerances.
    assert jnp.allclose(attn, ref_attn, atol=2e-2, rtol=2e-2), \
        float(jnp.max(jnp.abs(attn - ref_attn)))
    assert jnp.allclose(attn_weights, ref_w, atol=2e-2, rtol=2e-2), \
        float(jnp.max(jnp.abs(attn_weights - ref_w)))

    print("KERNEL_OK")
</pallas_src>

<mosaic_0001>
module attributes {stable_mosaic.version = 11 : i64} {
  func.func @kernel(%arg0: i32, %arg1: memref<1x8x32xbf16, #tpu.memory_space<vmem>>, %arg2: memref<32x96xbf16, #tpu.memory_space<vmem>>, %arg3: memref<32x32xbf16, #tpu.memory_space<vmem>>, %arg4: memref<1x96xf32, #tpu.memory_space<vmem>>, %arg5: memref<1x32xf32, #tpu.memory_space<vmem>>, %arg6: memref<1x8x32xf32, #tpu.memory_space<vmem>>, %arg7: memref<1x8x8xf32, #tpu.memory_space<vmem>>, %arg8: memref<8x32xbf16, #tpu.memory_space<vmem>>) attributes {dimension_semantics = [#tpu.dimension_semantics<parallel>], iteration_bounds = array<i64: 2>, scalar_prefetch = 0 : i64, scratch_operands = 1 : i64, tpu.core_type = #tpu.core_type<tc>, window_params = [{transform_indices = @transform_0, window_bounds = array<i64: 1, 8, 32>}, {pipeline_mode = #tpu.pipeline_mode<synchronous>, transform_indices = @transform_1, window_bounds = array<i64: 32, 96>}, {pipeline_mode = #tpu.pipeline_mode<synchronous>, transform_indices = @transform_2, window_bounds = array<i64: 32, 32>}, {pipeline_mode = #tpu.pipeline_mode<synchronous>, transform_indices = @transform_3, window_bounds = array<i64: 1, 96>}, {pipeline_mode = #tpu.pipeline_mode<synchronous>, transform_indices = @transform_4, window_bounds = array<i64: 1, 32>}, {transform_indices = @transform_5, window_bounds = array<i64: 1, 8, 32>}, {transform_indices = @transform_6, window_bounds = array<i64: 1, 8, 8>}]} {
    %c0 = arith.constant 0 : index
    %c0_0 = arith.constant 0 : index
    %c0_1 = arith.constant 0 : index
    %0 = vector.load %arg1[%c0, %c0_0, %c0_1] : memref<1x8x32xbf16, #tpu.memory_space<vmem>>, vector<1x8x32xbf16>
    %1 = vector.shape_cast %0 : vector<1x8x32xbf16> to vector<8x32xbf16>
    %c0_2 = arith.constant 0 : index
    %c0_3 = arith.constant 0 : index
    %2 = vector.load %arg2[%c0_2, %c0_3] : memref<32x96xbf16, #tpu.memory_space<vmem>>, vector<32x96xbf16>
    %cst = arith.constant dense<0.000000e+00> : vector<8x96xf32>
    %3 = tpu.matmul %1, %2, %cst {dimension_numbers = #tpu.dot_dimension_numbers<[1], [0], [0], [1], [0, 0, 1, 1], [], []>} : vector<8x32xbf16>, vector<32x96xbf16>, vector<8x96xf32> -> vector<8x96xf32>
    %c0_4 = arith.constant 0 : index
    %c0_5 = arith.constant 0 : index
    %4 = vector.load %arg4[%c0_4, %c0_5] : memref<1x96xf32, #tpu.memory_space<vmem>>, vector<1x96xf32>
    %5 = vector.broadcast %4 : vector<1x96xf32> to vector<8x96xf32>
    %6 = arith.addf %3, %5 : vector<8x96xf32>
    %7 = arith.truncf %6 : vector<8x96xf32> to vector<8x96xbf16>
    %8 = vector.extract_strided_slice %7 {offsets = [0, 0], sizes = [8, 8], strides = [1, 1]} : vector<8x96xbf16> to vector<8x8xbf16>
    %9 = vector.extract_strided_slice %7 {offsets = [0, 32], sizes = [8, 8], strides = [1, 1]} : vector<8x96xbf16> to vector<8x8xbf16>
    %10 = vector.extract_strided_slice %7 {offsets = [0, 64], sizes = [8, 8], strides = [1, 1]} : vector<8x96xbf16> to vector<8x8xbf16>
    %cst_6 = arith.constant dense<0.000000e+00> : vector<8x8xf32>
    %11 = tpu.matmul %8, %9, %cst_6 {dimension_numbers = #tpu.dot_dimension_numbers<[1], [1], [0], [0], [0, 0, 1, 0], [], []>} : vector<8x8xbf16>, vector<8x8xbf16>, vector<8x8xf32> -> vector<8x8xf32>
    %cst_7 = arith.constant dense<0xFF800000> : vector<8xf32>
    %12 = vector.multi_reduction <maximumf>, %11, %cst_7 [1] : vector<8x8xf32> to vector<8xf32>
    %13 = vector.shape_cast %12 : vector<8xf32> to vector<8x1xf32>
    %14 = vector.broadcast %13 : vector<8x1xf32> to vector<8x8xf32>
    %15 = arith.subf %11, %14 : vector<8x8xf32>
    %16 = math.exp %15 : vector<8x8xf32>
    %cst_8 = arith.constant dense<0.000000e+00> : vector<8xf32>
    %17 = vector.multi_reduction <add>, %16, %cst_8 [1] : vector<8x8xf32> to vector<8xf32>
    %18 = vector.shape_cast %17 : vector<8xf32> to vector<8x1xf32>
    %19 = tpu.reciprocal %18 {approx = true} : vector<8x1xf32> -> vector<8x1xf32>
    %20 = arith.mulf %18, %19 : vector<8x1xf32>
    %cst_9 = arith.constant 2.000000e+00 : f32
    %21 = vector.broadcast %cst_9 : f32 to vector<8x1xf32>
    %22 = arith.subf %21, %20 : vector<8x1xf32>
    %23 = arith.mulf %19, %22 : vector<8x1xf32>
    %24 = vector.broadcast %23 : vector<8x1xf32> to vector<8x8xf32>
    %25 = arith.mulf %16, %24 : vector<8x8xf32>
    %26 = arith.truncf %25 : vector<8x8xf32> to vector<8x8xbf16>
    %cst_10 = arith.constant dense<0.000000e+00> : vector<8x8xf32>
    %27 = tpu.matmul %26, %10, %cst_10 {dimension_numbers = #tpu.dot_dimension_numbers<[1], [0], [0], [1], [0, 0, 1, 1], [], []>} : vector<8x8xbf16>, vector<8x8xbf16>, vector<8x8xf32> -> vector<8x8xf32>
    %28 = arith.truncf %27 : vector<8x8xf32> to vector<8x8xbf16>
    %c0_11 = arith.constant 0 : index
    %c0_12 = arith.constant 0 : index
    %29 = vector.load %arg8[%c0_11, %c0_12] : memref<8x32xbf16, #tpu.memory_space<vmem>>, vector<8x8xbf16>
    tpu.vector_store %arg8[%c0_11, %c0_12], %28 {strides = array<i32>} : memref<8x32xbf16, #tpu.memory_space<vmem>>, vector<8x8xbf16>,
    %30 = vector.extract_strided_slice %7 {offsets = [0, 8], sizes = [8, 8], strides = [1, 1]} : vector<8x96xbf16> to vector<8x8xbf16>
    %31 = vector.extract_strided_slice %7 {offsets = [0, 40], sizes = [8, 8], strides = [1, 1]} : vector<8x96xbf16> to vector<8x8xbf16>
    %32 = vector.extract_strided_slice %7 {offsets = [0, 72], sizes = [8, 8], strides = [1, 1]} : vector<8x96xbf16> to vector<8x8xbf16>
    %cst_13 = arith.constant dense<0.000000e+00> : vector<8x8xf32>
    %33 = tpu.matmul %30, %31, %cst_13 {dimension_numbers = #tpu.dot_dimension_numbers<[1], [1], [0], [0], [0, 0, 1, 0], [], []>} : vector<8x8xbf16>, vector<8x8xbf16>, vector<8x8xf32> -> vector<8x8xf32>
    %cst_14 = arith.constant dense<0xFF800000> : vector<8xf32>
    %34 = vector.multi_reduction <maximumf>, %33, %cst_14 [1] : vector<8x8xf32> to vector<8xf32>
    %35 = vector.shape_cast %34 : vector<8xf32> to vector<8x1xf32>
    %36 = vector.broadcast %35 : vector<8x1xf32> to vector<8x8xf32>
    %37 = arith.subf %33, %36 : vector<8x8xf32>
    %38 = math.exp %37 : vector<8x8xf32>
    %cst_15 = arith.constant dense<0.000000e+00> : vector<8xf32>
    %39 = vector.multi_reduction <add>, %38, %cst_15 [1] : vector<8x8xf32> to vector<8xf32>
    %40 = vector.shape_cast %39 : vector<8xf32> to vector<8x1xf32>
    %41 = tpu.reciprocal %40 {approx = true} : vector<8x1xf32> -> vector<8x1xf32>
    %42 = arith.mulf %40, %41 : vector<8x1xf32>
    %cst_16 = arith.constant 2.000000e+00 : f32
    %43 = vector.broadcast %cst_16 : f32 to vector<8x1xf32>
    %44 = arith.subf %43, %42 : vector<8x1xf32>
    %45 = arith.mulf %41, %44 : vector<8x1xf32>
    %46 = vector.broadcast %45 : vector<8x1xf32> to vector<8x8xf32>
    %47 = arith.mulf %38, %46 : vector<8x8xf32>
    %48 = arith.truncf %47 : vector<8x8xf32> to vector<8x8xbf16>
    %cst_17 = arith.constant dense<0.000000e+00> : vector<8x8xf32>
    %49 = tpu.matmul %48, %32, %cst_17 {dimension_numbers = #tpu.dot_dimension_numbers<[1], [0], [0], [1], [0, 0, 1, 1], [], []>} : vector<8x8xbf16>, vector<8x8xbf16>, vector<8x8xf32> -> vector<8x8xf32>
    %50 = arith.truncf %49 : vector<8x8xf32> to vector<8x8xbf16>
    %c0_18 = arith.constant 0 : index
    %c8 = arith.constant 8 : index
    %51 = vector.load %arg8[%c0_18, %c8] : memref<8x32xbf16, #tpu.memory_space<vmem>>, vector<8x8xbf16>
    tpu.vector_store %arg8[%c0_18, %c8], %50 {strides = array<i32>} : memref<8x32xbf16, #tpu.memory_space<vmem>>, vector<8x8xbf16>,
    %52 = arith.addf %25, %47 : vector<8x8xf32>
    %53 = vector.extract_strided_slice %7 {offsets = [0, 16], sizes = [8, 8], strides = [1, 1]} : vector<8x96xbf16> to vector<8x8xbf16>
    %54 = vector.extract_strided_slice %7 {offsets = [0, 48], sizes = [8, 8], strides = [1, 1]} : vector<8x96xbf16> to vector<8x8xbf16>
    %55 = vector.extract_strided_slice %7 {offsets = [0, 80], sizes = [8, 8], strides = [1, 1]} : vector<8x96xbf16> to vector<8x8xbf16>
    %cst_19 = arith.constant dense<0.000000e+00> : vector<8x8xf32>
    %56 = tpu.matmul %53, %54, %cst_19 {dimension_numbers = #tpu.dot_dimension_numbers<[1], [1], [0], [0], [0, 0, 1, 0], [], []>} : vector<8x8xbf16>, vector<8x8xbf16>, vector<8x8xf32> -> vector<8x8xf32>
    %cst_20 = arith.constant dense<0xFF800000> : vector<8xf32>
    %57 = vector.multi_reduction <maximumf>, %56, %cst_20 [1] : vector<8x8xf32> to vector<8xf32>
    %58 = vector.shape_cast %57 : vector<8xf32> to vector<8x1xf32>
    %59 = vector.broadcast %58 : vector<8x1xf32> to vector<8x8xf32>
    %60 = arith.subf %56, %59 : vector<8x8xf32>
    %61 = math.exp %60 : vector<8x8xf32>
    %cst_21 = arith.constant dense<0.000000e+00> : vector<8xf32>
    %62 = vector.multi_reduction <add>, %61, %cst_21 [1] : vector<8x8xf32> to vector<8xf32>
    %63 = vector.shape_cast %62 : vector<8xf32> to vector<8x1xf32>
    %64 = tpu.reciprocal %63 {approx = true} : vector<8x1xf32> -> vector<8x1xf32>
    %65 = arith.mulf %63, %64 : vector<8x1xf32>
    %cst_22 = arith.constant 2.000000e+00 : f32
    %66 = vector.broadcast %cst_22 : f32 to vector<8x1xf32>
    %67 = arith.subf %66, %65 : vector<8x1xf32>
    %68 = arith.mulf %64, %67 : vector<8x1xf32>
    %69 = vector.broadcast %68 : vector<8x1xf32> to vector<8x8xf32>
    %70 = arith.mulf %61, %69 : vector<8x8xf32>
    %71 = arith.truncf %70 : vector<8x8xf32> to vector<8x8xbf16>
    %cst_23 = arith.constant dense<0.000000e+00> : vector<8x8xf32>
    %72 = tpu.matmul %71, %55, %cst_23 {dimension_numbers = #tpu.dot_dimension_numbers<[1], [0], [0], [1], [0, 0, 1, 1], [], []>} : vector<8x8xbf16>, vector<8x8xbf16>, vector<8x8xf32> -> vector<8x8xf32>
    %73 = arith.truncf %72 : vector<8x8xf32> to vector<8x8xbf16>
    %c0_24 = arith.constant 0 : index
    %c16 = arith.constant 16 : index
    %74 = vector.load %arg8[%c0_24, %c16] : memref<8x32xbf16, #tpu.memory_space<vmem>>, vector<8x8xbf16>
    tpu.vector_store %arg8[%c0_24, %c16], %73 {strides = array<i32>} : memref<8x32xbf16, #tpu.memory_space<vmem>>, vector<8x8xbf16>,
    %75 = arith.addf %52, %70 : vector<8x8xf32>
    %76 = vector.extract_strided_slice %7 {offsets = [0, 24], sizes = [8, 8], strides = [1, 1]} : vector<8x96xbf16> to vector<8x8xbf16>
    %77 = vector.extract_strided_slice %7 {offsets = [0, 56], sizes = [8, 8], strides = [1, 1]} : vector<8x96xbf16> to vector<8x8xbf16>
    %78 = vector.extract_strided_slice %7 {offsets = [0, 88], sizes = [8, 8], strides = [1, 1]} : vector<8x96xbf16> to vector<8x8xbf16>
    %cst_25 = arith.constant dense<0.000000e+00> : vector<8x8xf32>
    %79 = tpu.matmul %76, %77, %cst_25 {dimension_numbers = #tpu.dot_dimension_numbers<[1], [1], [0], [0], [0, 0, 1, 0], [], []>} : vector<8x8xbf16>, vector<8x8xbf16>, vector<8x8xf32> -> vector<8x8xf32>
    %cst_26 = arith.constant dense<0xFF800000> : vector<8xf32>
    %80 = vector.multi_reduction <maximumf>, %79, %cst_26 [1] : vector<8x8xf32> to vector<8xf32>
    %81 = vector.shape_cast %80 : vector<8xf32> to vector<8x1xf32>
    %82 = vector.broadcast %81 : vector<8x1xf32> to vector<8x8xf32>
    %83 = arith.subf %79, %82 : vector<8x8xf32>
    %84 = math.exp %83 : vector<8x8xf32>
    %cst_27 = arith.constant dense<0.000000e+00> : vector<8xf32>
    %85 = vector.multi_reduction <add>, %84, %cst_27 [1] : vector<8x8xf32> to vector<8xf32>
    %86 = vector.shape_cast %85 : vector<8xf32> to vector<8x1xf32>
    %87 = tpu.reciprocal %86 {approx = true} : vector<8x1xf32> -> vector<8x1xf32>
    %88 = arith.mulf %86, %87 : vector<8x1xf32>
    %cst_28 = arith.constant 2.000000e+00 : f32
    %89 = vector.broadcast %cst_28 : f32 to vector<8x1xf32>
    %90 = arith.subf %89, %88 : vector<8x1xf32>
    %91 = arith.mulf %87, %90 : vector<8x1xf32>
    %92 = vector.broadcast %91 : vector<8x1xf32> to vector<8x8xf32>
    %93 = arith.mulf %84, %92 : vector<8x8xf32>
    %94 = arith.truncf %93 : vector<8x8xf32> to vector<8x8xbf16>
    %cst_29 = arith.constant dense<0.000000e+00> : vector<8x8xf32>
    %95 = tpu.matmul %94, %78, %cst_29 {dimension_numbers = #tpu.dot_dimension_numbers<[1], [0], [0], [1], [0, 0, 1, 1], [], []>} : vector<8x8xbf16>, vector<8x8xbf16>, vector<8x8xf32> -> vector<8x8xf32>
    %96 = arith.truncf %95 : vector<8x8xf32> to vector<8x8xbf16>
    %c0_30 = arith.constant 0 : index
    %c24 = arith.constant 24 : index
    %97 = vector.load %arg8[%c0_30, %c24] : memref<8x32xbf16, #tpu.memory_space<vmem>>, vector<8x8xbf16>
    tpu.vector_store %arg8[%c0_30, %c24], %96 {strides = array<i32>} : memref<8x32xbf16, #tpu.memory_space<vmem>>, vector<8x8xbf16>,
    %98 = arith.addf %75, %93 : vector<8x8xf32>
    %c0_31 = arith.constant 0 : index
    %c0_32 = arith.constant 0 : index
    %99 = vector.load %arg8[%c0_31, %c0_32] : memref<8x32xbf16, #tpu.memory_space<vmem>>, vector<8x32xbf16>
    %c0_33 = arith.constant 0 : index
    %c0_34 = arith.constant 0 : index
    %100 = vector.load %arg3[%c0_33, %c0_34] : memref<32x32xbf16, #tpu.memory_space<vmem>>, vector<32x32xbf16>
    %cst_35 = arith.constant dense<0.000000e+00> : vector<8x32xf32>
    %101 = tpu.matmul %99, %100, %cst_35 {dimension_numbers = #tpu.dot_dimension_numbers<[1], [0], [0], [1], [0, 0, 1, 1], [], []>} : vector<8x32xbf16>, vector<32x32xbf16>, vector<8x32xf32> -> vector<8x32xf32>
    %c0_36 = arith.constant 0 : index
    %c0_37 = arith.constant 0 : index
    %102 = vector.load %arg5[%c0_36, %c0_37] : memref<1x32xf32, #tpu.memory_space<vmem>>, vector<1x32xf32>
    %103 = vector.broadcast %102 : vector<1x32xf32> to vector<8x32xf32>
    %104 = arith.addf %101, %103 : vector<8x32xf32>
    %c0_38 = arith.constant 0 : index
    %c0_39 = arith.constant 0 : index
    %c0_40 = arith.constant 0 : index
    %105 = vector.load %arg6[%c0_38, %c0_39, %c0_40] : memref<1x8x32xf32, #tpu.memory_space<vmem>>, vector<1x8x32xf32>
    %106 = vector.shape_cast %105 : vector<1x8x32xf32> to vector<8x32xf32>
    %107 = vector.shape_cast %104 : vector<8x32xf32> to vector<1x8x32xf32>
    tpu.vector_store %arg6[%c0_38, %c0_39, %c0_40], %107 {strides = array<i32>} : memref<1x8x32xf32, #tpu.memory_space<vmem>>, vector<1x8x32xf32>,
    %cst_41 = arith.constant 2.500000e-01 : f32
    %108 = vector.broadcast %cst_41 : f32 to vector<8x8xf32>
    %109 = arith.mulf %98, %108 : vector<8x8xf32>
    %c0_42 = arith.constant 0 : index
    %c0_43 = arith.constant 0 : index
    %c0_44 = arith.constant 0 : index
    %110 = vector.load %arg7[%c0_42, %c0_43, %c0_44] : memref<1x8x8xf32, #tpu.memory_space<vmem>>, vector<1x8x8xf32>
    %111 = vector.shape_cast %110 : vector<1x8x8xf32> to vector<8x8xf32>
    %112 = vector.shape_cast %109 : vector<8x8xf32> to vector<1x8x8xf32>
    tpu.vector_store %arg7[%c0_42, %c0_43, %c0_44], %112 {strides = array<i32>} : memref<1x8x8xf32, #tpu.memory_space<vmem>>, vector<1x8x8xf32>,
    return
  }
  func.func @transform_0(%arg0: i32) -> (i32, i32, i32) {
    %c0_i32 = arith.constant 0 : i32
    %c0_i32_0 = arith.constant 0 : i32
    %c0_i32_1 = arith.constant 0 : i32
    return %arg0, %c0_i32, %c0_i32_0 : i32, i32, i32
  }
  func.func @transform_1(%arg0: i32) -> (i32, i32) {
    %c0_i32 = arith.constant 0 : i32
    %c0_i32_0 = arith.constant 0 : i32
    %c0_i32_1 = arith.constant 0 : i32
    return %c0_i32, %c0_i32_0 : i32, i32
  }
  func.func @transform_2(%arg0: i32) -> (i32, i32) {
    %c0_i32 = arith.constant 0 : i32
    %c0_i32_0 = arith.constant 0 : i32
    %c0_i32_1 = arith.constant 0 : i32
    return %c0_i32, %c0_i32_0 : i32, i32
  }
  func.func @transform_3(%arg0: i32) -> (i32, i32) {
    %c0_i32 = arith.constant 0 : i32
    %c0_i32_0 = arith.constant 0 : i32
    %c0_i32_1 = arith.constant 0 : i32
    return %c0_i32, %c0_i32_0 : i32, i32
  }
  func.func @transform_4(%arg0: i32) -> (i32, i32) {
    %c0_i32 = arith.constant 0 : i32
    %c0_i32_0 = arith.constant 0 : i32
    %c0_i32_1 = arith.constant 0 : i32
    return %c0_i32, %c0_i32_0 : i32, i32
  }
  func.func @transform_5(%arg0: i32) -> (i32, i32, i32) {
    %c0_i32 = arith.constant 0 : i32
    %c0_i32_0 = arith.constant 0 : i32
    %c0_i32_1 = arith.constant 0 : i32
    return %arg0, %c0_i32, %c0_i32_0 : i32, i32, i32
  }
  func.func @transform_6(%arg0: i32) -> (i32, i32, i32) {
    %c0_i32 = arith.constant 0 : i32
    %c0_i32_0 = arith.constant 0 : i32
    %c0_i32_1 = arith.constant 0 : i32
    return %arg0, %c0_i32, %c0_i32_0 : i32, i32, i32
  }
}

</mosaic_0001>

<llo_original>
// kernel: tpu_custom_call.1
$region0: #{tpu_custom_call.1}
  #allocation0 [shape = 'u32[]', space=smem, size = 0x4, offset = 0x4, fixed_abs, tag = 'smem constant byte address 0x4 - core index']
  #allocation1 [shape = 'u32[72,128]{1,0:T(1,128)}', space=vmem, size = 0x9000, scoped, tag = 'internal scratch']
  #allocation2 [shape = 'bf16[8,32]{1,0:T(8,128)(2,1)}', space=vmem, size = 0x800, scoped, tag = 'scratch operand']
  %s0 = inlined_call_operand.hbm [shape: bf16[2,8,32], index: 0, kind: input, shape index: {}]
  %s1 = inlined_call_operand.hbm [shape: bf16[32,96], index: 1, kind: input, shape index: {}]
  %s2 = inlined_call_operand.hbm [shape: bf16[32,32], index: 2, kind: input, shape index: {}]
  %s3 = inlined_call_operand.vmem [shape: f32[1,96], index: 3, kind: input, shape index: {}]
  %s4 = inlined_call_operand.vmem [shape: f32[1,32], index: 4, kind: input, shape index: {}]
  %s5 = inlined_call_operand.hbm [shape: f32[2,8,32], index: 5, kind: output, shape index: {0}]
  %s6 = inlined_call_operand.hbm [shape: f32[2,8,8], index: 6, kind: output, shape index: {1}]
  %7 = xla_tuple %s5, %s6
  %s8 = sld [smem:[#allocation0]]
  $region73: #{tpu_custom_call.1} parent=0
    _
  %s10 = ssub.s32 1, %s8
  %s11 = scalar_select 0, %s10, %s8
  $region1: #{tpu_custom_call.1} parent=0
    #allocation3 [shape = 'u8[4096]{0}', space=vmem, size = 0x1000, scoped, tag = 'input window, operand 0']
    #allocation4 [shape = 's32[2]{0}', space=sflag, size = 0x8, scoped, tag = 'scoped memory for tpu_custom_call.1']
    #allocation5 [shape = 's32[2]{0}', space=sflag, size = 0x8, scoped, tag = 'scoped memory for tpu_custom_call.1']
    #allocation6 [shape = 'u8[8192]{0}', space=vmem, size = 0x2000, scoped, tag = 'input window, operand 1, single buffered']
    #allocation7 [shape = 's32[1]{0}', space=sflag, size = 0x4, scoped, tag = 'scoped memory for tpu_custom_call.1']
    #allocation8 [shape = 'u8[8192]{0}', space=vmem, size = 0x2000, scoped, tag = 'input window, operand 2, single buffered']
    #allocation9 [shape = 'u8[8192]{0}', space=vmem, size = 0x2000, scoped, tag = 'output window, operand 0']
    #allocation10 [shape = 'u8[8192]{0}', space=vmem, size = 0x2000, scoped, tag = 'output window, operand 1']
    #allocation11 [shape = 's32[2]{0}', space=sflag, size = 0x8, scoped, tag = 'scoped memory for tpu_custom_call.1']
    %12 = vsyncpa [#allocation4], 0
    %s13 = scalar_lea.sflag [#allocation4], 1
    %14 = vsyncpa %s13, 0
    %15 = vsyncpa [#allocation7], 0
    %16 = vsyncpa [#allocation5], 0
    %s17 = scalar_lea.sflag [#allocation5], 1
    %18 = vsyncpa %s17, 0
    %19 = vsyncpa [#allocation11], 0
    %s20 = scalar_lea.sflag [#allocation11], 1
    %21 = vsyncpa %s20, 0
    loop: start=0, step=1, limit=4
    $region2: #{tpu_custom_call.1} parent=1 // loop_pre_header
      _
    $region3: #{tpu_custom_call.1} parent=1 // loop_header
      %s23 = sphi 0, %s27
      %p24 = scmp.ge.s32.totalorder %s23, 4
      %s33 = sphi 0, %s35
      %s36 = sphi 0, %s33
      %s37 = sphi 0, %s36
      %s53 = sphi 0, %s37
      %s57 = sphi 0, %s57
      %s59 = sphi 0, %s57
      %s60 = sphi 0, %s59
      %s74 = sphi 0, %s60
      %s78 = sphi 0, %s78
      %s80 = sphi 0, %s78
      %s81 = sphi 0, %s80
      %s95 = sphi 0, %s81
      %s99 = sphi 0, %s99
      %s101 = sphi 0, %s99
      %s102 = sphi 0, %s101
      %s116 = sphi 0, %s102
      %s120 = sphi 0, %s120
      %s122 = sphi 0, %s120
      %s123 = sphi 0, %s122
      %s137 = sphi 0, %s123
      %s143 = sphi 0, %s145
      %s146 = sphi 0, %s143
      %s147 = sphi 0, %s146
      %s163 = sphi 0, %s147
      %s169 = sphi 0, %s171
      %s172 = sphi 0, %s169
      %s173 = sphi 0, %s172
      %s189 = sphi 0, %s173
    $region4: #{tpu_custom_call.1} parent=1 // loop_header_branch
      %26 = sbr.rel (%p24) target = $region8
    $region5: #{tpu_custom_call.1} parent=1 // loop_body
      %s28 = ssub.s32 %s23, 1
      %s29 = ssub.s32 %s23, 2
      %s30 = sadd.s32 %s23, 1
      %s31 = ssub.s32 %s23, %s30
      %p32 = scmp.eq.s32.totalorder %s31, 0
      %s34 = sadd.s32 %s33, 1
      %s35 = scalar_select %p32, %s33, %s34
      %p38 = pneg %p32
      %p39 = scmp.eq.s32.totalorder %s23, 1
      %p40 = por %p38, %p39
      %p41 = scmp.ne.s32.totalorder %s33, %s36
      %p42 = scmp.eq.s32.totalorder %s23, 0
      %p43 = por %p41, %p42
      %p44 = scmp.ne.s32.totalorder %s33, %s36
      %p45 = scmp.eq.s32.totalorder %s28, 1
      %p46 = por %p44, %p45
      %p47 = scmp.ne.s32.totalorder %s36, %s37
      %p48 = scmp.eq.s32.totalorder %s28, 0
      %p49 = por %p47, %p48
      %p50 = scmp.ne.s32.totalorder %s36, %s37
      %p51 = scmp.eq.s32.totalorder %s29, 1
      %p52 = por %p50, %p51
      %p54 = scmp.ne.s32.totalorder %s37, %s53
      %p55 = scmp.eq.s32.totalorder %s29, 0
      %p56 = por %p54, %p55
      %s58 = sadd.s32 %s57, 1
      %p61 = scmp.eq.s32.totalorder %s23, 1
      %p62 = scmp.ne.s32.totalorder %s57, %s59
      %p63 = scmp.eq.s32.totalorder %s23, 0
      %p64 = por %p62, %p63
      %p65 = scmp.ne.s32.totalorder %s57, %s59
      %p66 = scmp.eq.s32.totalorder %s28, 1
      %p67 = por %p65, %p66
      %p68 = scmp.ne.s32.totalorder %s59, %s60
      %p69 = scmp.eq.s32.totalorder %s28, 0
      %p70 = por %p68, %p69
      %p71 = scmp.ne.s32.totalorder %s59, %s60
      %p72 = scmp.eq.s32.totalorder %s29, 1
      %p73 = por %p71, %p72
      %p75 = scmp.ne.s32.totalorder %s60, %s74
      %p76 = scmp.eq.s32.totalorder %s29, 0
      %p77 = por %p75, %p76
      %s79 = sadd.s32 %s78, 1
      %p82 = scmp.eq.s32.totalorder %s23, 1
      %p83 = scmp.ne.s32.totalorder %s78, %s80
      %p84 = scmp.eq.s32.totalorder %s23, 0
      %p85 = por %p83, %p84
      %p86 = scmp.ne.s32.totalorder %s78, %s80
      %p87 = scmp.eq.s32.totalorder %s28, 1
      %p88 = por %p86, %p87
      %p89 = scmp.ne.s32.totalorder %s80, %s81
      %p90 = scmp.eq.s32.totalorder %s28, 0
      %p91 = por %p89, %p90
      %p92 = scmp.ne.s32.totalorder %s80, %s81
      %p93 = scmp.eq.s32.totalorder %s29, 1
      %p94 = por %p92, %p93
      %p96 = scmp.ne.s32.totalorder %s81, %s95
      %p97 = scmp.eq.s32.totalorder %s29, 0
      %p98 = por %p96, %p97
      %s100 = sadd.s32 %s99, 1
      %p103 = scmp.eq.s32.totalorder %s23, 1
      %p104 = scmp.ne.s32.totalorder %s99, %s101
      %p105 = scmp.eq.s32.totalorder %s23, 0
      %p106 = por %p104, %p105
      %p107 = scmp.ne.s32.totalorder %s99, %s101
      %p108 = scmp.eq.s32.totalorder %s28, 1
      %p109 = por %p107, %p108
      %p110 = scmp.ne.s32.totalorder %s101, %s102
      %p111 = scmp.eq.s32.totalorder %s28, 0
      %p112 = por %p110, %p111
      %p113 = scmp.ne.s32.totalorder %s101, %s102
      %p114 = scmp.eq.s32.totalorder %s29, 1
      %p115 = por %p113, %p114
      %p117 = scmp.ne.s32.totalorder %s102, %s116
      %p118 = scmp.eq.s32.totalorder %s29, 0
      %p119 = por %p117, %p118
      %s121 = sadd.s32 %s120, 1
      %p124 = scmp.eq.s32.totalorder %s23, 1
      %p125 = scmp.ne.s32.totalorder %s120, %s122
      %p126 = scmp.eq.s32.totalorder %s23, 0
      %p127 = por %p125, %p126
      %p128 = scmp.ne.s32.totalorder %s120, %s122
      %p129 = scmp.eq.s32.totalorder %s28, 1
      %p130 = por %p128, %p129
      %p131 = scmp.ne.s32.totalorder %s122, %s123
      %p132 = scmp.eq.s32.totalorder %s28, 0
      %p133 = por %p131, %p132
      %p134 = scmp.ne.s32.totalorder %s122, %s123
      %p135 = scmp.eq.s32.totalorder %s29, 1
      %p136 = por %p134, %p135
      %p138 = scmp.ne.s32.totalorder %s123, %s137
      %p139 = scmp.eq.s32.totalorder %s29, 0
      %p140 = por %p138, %p139
      %s141 = ssub.s32 %s23, %s30
      %p142 = scmp.eq.s32.totalorder %s141, 0
      %s144 = sadd.s32 %s143, 1
      %s145 = scalar_select %p142, %s143, %s144
      %p148 = pneg %p142
      %p149 = scmp.eq.s32.totalorder %s23, 1
      %p150 = por %p148, %p149
      %p151 = scmp.ne.s32.totalorder %s143, %s146
      %p152 = scmp.eq.s32.totalorder %s23, 0
      %p153 = por %p151, %p152
      %p154 = scmp.ne.s32.totalorder %s143, %s146
      %p155 = scmp.eq.s32.totalorder %s28, 1
      %p156 = por %p154, %p155
      %p157 = scmp.ne.s32.totalorder %s146, %s147
      %p158 = scmp.eq.s32.totalorder %s28, 0
      %p159 = por %p157, %p158
      %p160 = scmp.ne.s32.totalorder %s146, %s147
      %p161 = scmp.eq.s32.totalorder %s29, 1
      %p162 = por %p160, %p161
      %p164 = scmp.ne.s32.totalorder %s147, %s163
      %p165 = scmp.eq.s32.totalorder %s29, 0
      %p166 = por %p164, %p165
      %s167 = ssub.s32 %s23, %s30
      %p168 = scmp.eq.s32.totalorder %s167, 0
      %s170 = sadd.s32 %s169, 1
      %s171 = scalar_select %p168, %s169, %s170
      %p174 = pneg %p168
      %p175 = scmp.eq.s32.totalorder %s23, 1
      %p176 = por %p174, %p175
      %p177 = scmp.ne.s32.totalorder %s169, %s172
      %p178 = scmp.eq.s32.totalorder %s23, 0
      %p179 = por %p177, %p178
      %p180 = scmp.ne.s32.totalorder %s169, %s172
      %p181 = scmp.eq.s32.totalorder %s28, 1
      %p182 = por %p180, %p181
      %p183 = scmp.ne.s32.totalorder %s172, %s173
      %p184 = scmp.eq.s32.totalorder %s28, 0
      %p185 = por %p183, %p184
      %p186 = scmp.ne.s32.totalorder %s172, %s173
      %p187 = scmp.eq.s32.totalorder %s29, 1
      %p188 = por %p186, %p187
      %p190 = scmp.ne.s32.totalorder %s173, %s189
      %p191 = scmp.eq.s32.totalorder %s29, 0
      %p192 = por %p190, %p191
      %p193 = scmp.le.s32.totalorder 1, %s23
      %p194 = scmp.lt.s32.totalorder %s23, 3
      %p195 = pnand %p193, %p194
      %p196 = pneg %p195
      // Predicated region
      $region9: #{tpu_custom_call.1} parent=5 // pred_check
        _
      $region10: #{tpu_custom_call.1} parent=5 // pred_check_branch
        %198 = sbr.rel (%p195) target = $region12
      $region11: #{tpu_custom_call.1} parent=5 // pred_region
        %s199 = ssub.s32 %s23, 1
        // Predicated region
        $region13: #{tpu_custom_call.1} parent=11 // pred_check
          %p200 = pneg %p70
        $region14: #{tpu_custom_call.1} parent=11 // pred_check_branch
          %202 = sbr.rel (%p200) target = $region16
        $region15: #{tpu_custom_call.1} parent=11 // pred_region
          %204 = vsyncadd [#allocation7], 0
          %s205 = sshll.u32 %s1, 4
          %s206 = int_to_ptr.hbm [resolvable:$true] %s205
          %s207 = sshll.u32 [#allocation6], 4
          %s208 = int_to_ptr.vmem [resolvable:$true] %s207
          %213 = dma.hbm_to_vmem [thread:$0]  %s206, 256, %s208, [#allocation7], 64, 64, 4
        $region16: #{tpu_custom_call.1} parent=11 // pred_fallthru
          _
        // Predicated region
        $region17: #{tpu_custom_call.1} parent=11 // pred_check
          %p214 = pneg %p91
        $region18: #{tpu_custom_call.1} parent=11 // pred_check_branch
          %216 = sbr.rel (%p214) target = $region20
        $region19: #{tpu_custom_call.1} parent=11 // pred_region
          %218 = vsyncadd [#allocation7], 0
          %s219 = sshll.u32 %s2, 4
          %s220 = int_to_ptr.hbm [resolvable:$true] %s219
          %s221 = sshll.u32 [#allocation8], 4
          %s222 = int_to_ptr.vmem [resolvable:$true] %s221
          %227 = dma.hbm_to_vmem [thread:$0]  %s220, 256, %s222, [#allocation7], 64, 64, 4
        $region20: #{tpu_custom_call.1} parent=11 // pred_fallthru
          _
        // Predicated region
        $region21: #{tpu_custom_call.1} parent=11 // pred_check
          %p228 = pneg %p112
        $region22: #{tpu_custom_call.1} parent=11 // pred_check_branch
          %230 = sbr.rel (%p228) target = $region24
        $region23: #{tpu_custom_call.1} parent=11 // pred_region
          _
        $region24: #{tpu_custom_call.1} parent=11 // pred_fallthru
          _
        // Predicated region
        $region25: #{tpu_custom_call.1} parent=11 // pred_check
          %p231 = pneg %p133
        $region26: #{tpu_custom_call.1} parent=11 // pred_check_branch
          %233 = sbr.rel (%p231) target = $region28
        $region27: #{tpu_custom_call.1} parent=11 // pred_region
          _
        $region28: #{tpu_custom_call.1} parent=11 // pred_fallthru
          _
      $region12: #{tpu_custom_call.1} parent=5 // pred_fallthru
        _
      %p234 = scmp.lt.s32.totalorder %s23, 2
      // Predicated region
      $region29: #{tpu_custom_call.1} parent=5 // pred_check
        %p235 = pneg %p234
      $region30: #{tpu_custom_call.1} parent=5 // pred_check_branch
        %237 = sbr.rel (%p235) target = $region32
      $region31: #{tpu_custom_call.1} parent=5 // pred_region
        // Predicated region
        $region33: #{tpu_custom_call.1} parent=31 // pred_check
          %p238 = pneg %p43
        $region34: #{tpu_custom_call.1} parent=31 // pred_check_branch
          %240 = sbr.rel (%p238) target = $region36
        $region35: #{tpu_custom_call.1} parent=31 // pred_region
          %s241 = sand.u32 %s33, 1
          %s242 = scalar_lea.sflag [#allocation4], %s241
          %s243 = sand.u32 %s33, 1
          %s244 = smul.addr %s243, 4
          %s245 = scalar_lea.vmem [#allocation3], %s244
          %247 = vsyncadd %s242, 0
          %s248 = smul.addr %s23, 4
          %s249 = scalar_lea.hbm %s0, %s248
          %s251 = sshll.u32 %s249, 4
          %s252 = int_to_ptr.hbm [resolvable:$true] %s251
          %s253 = sshll.u32 %s245, 4
          %s254 = int_to_ptr.vmem [resolvable:$true] %s253
          %256 = dma.hbm_to_vmem [thread:$0]  %s252, 64, %s254, %s242
        $region36: #{tpu_custom_call.1} parent=31 // pred_fallthru
          _
      $region32: #{tpu_custom_call.1} parent=5 // pred_fallthru
        _
      %p257 = scmp.le.s32.totalorder 1, %s23
      %p258 = scmp.lt.s32.totalorder %s23, 3
      %p259 = pnand %p257, %p258
      %p260 = pneg %p259
      // Predicated region
      $region37: #{tpu_custom_call.1} parent=5 // pred_check
        _
      $region38: #{tpu_custom_call.1} parent=5 // pred_check_branch
        %262 = sbr.rel (%p259) target = $region40
      $region39: #{tpu_custom_call.1} parent=5 // pred_region
        %s263 = ssub.s32 %s23, 1
        %s264 = sand.u32 %s36, 1
        %s265 = scalar_lea.sflag [#allocation4], %s264
        %s266 = sand.u32 %s36, 1
        %s267 = smul.addr %s266, 4
        %s268 = scalar_lea.vmem [#allocation3], %s267
        // Predicated region
        $region41: #{tpu_custom_call.1} parent=39 // pred_check
          %p269 = pneg %p49
        $region42: #{tpu_custom_call.1} parent=39 // pred_check_branch
          %271 = sbr.rel (%p269) target = $region44
        $region43: #{tpu_custom_call.1} parent=39 // pred_region
          %273 = dma.done %s265, 64
        $region44: #{tpu_custom_call.1} parent=39 // pred_fallthru
          _
        // Predicated region
        $region45: #{tpu_custom_call.1} parent=39 // pred_check
          %p274 = pneg %p70
        $region46: #{tpu_custom_call.1} parent=39 // pred_check_branch
          %276 = sbr.rel (%p274) target = $region48
        $region47: #{tpu_custom_call.1} parent=39 // pred_region
          %278 = dma.done [#allocation7], 256
        $region48: #{tpu_custom_call.1} parent=39 // pred_fallthru
          _
        // Predicated region
        $region49: #{tpu_custom_call.1} parent=39 // pred_check
          %p279 = pneg %p91
        $region50: #{tpu_custom_call.1} parent=39 // pred_check_branch
          %281 = sbr.rel (%p279) target = $region52
        $region51: #{tpu_custom_call.1} parent=39 // pred_region
          %283 = dma.done [#allocation7], 256
        $region52: #{tpu_custom_call.1} parent=39 // pred_fallthru
          _
        %s284 = sand.u32 %s36, 1
        %s285 = scalar_lea.sflag [#allocation4], %s284
        %s286 = sand.u32 %s36, 1
        %s287 = smul.addr %s286, 4
        %s288 = scalar_lea.vmem [#allocation3], %s287
        %p289 = pneg %p49
        %p290 = pneg %p46
        %p291 = pneg %p70
        %p292 = pneg %p67
        %p293 = pneg %p91
        %p294 = pneg %p88
        %p295 = pneg %p112
        %p296 = pneg %p109
        %p297 = pneg %p133
        %p298 = pneg %p130
        %p299 = pneg %p159
        %p300 = pneg %p156
        %s301 = sand.u32 %s146, 1
        %s302 = scalar_lea.sflag [#allocation5], %s301
        %s303 = sand.u32 %s146, 1
        %s304 = smul.addr %s303, 8
        %s305 = scalar_lea.vmem [#allocation9], %s304
        %p306 = pneg %p185
        %p307 = pneg %p182
        %s308 = sand.u32 %s172, 1
        %s309 = scalar_lea.sflag [#allocation11], %s308
        %s310 = sand.u32 %s172, 1
        %s311 = smul.addr %s310, 8
        %s312 = scalar_lea.vmem [#allocation10], %s311
        %v314 = vld [vmem:[%s268] sm:$0xf]
        %v315 = vld [vmem:[#allocation6] sm:$0xf]
        %v316 = vld [vmem:[#allocation6 + $0x4] sm:$0xf]
        %v317 = vld [vmem:[#allocation6 + $0x8] sm:$0xf]
        %v318 = vld [vmem:[#allocation6 + $0xc] sm:$0xf]
        %v319 = vld [vmem:[%s3] sm:$0x1]
        %v321 = vperm.slane %v319, 0
        %v327 = vunpack.c.l.b16 %v315
        %v328 = vunpack.c.l.b16 %v316
        %v329 = vunpack.c.l.b16 %v317
        %v330 = vunpack.c.l.b16 %v318
        %v331 = vpack.c.b16 %v328, %v327
        %v332 = vpack.c.b16 %v330, %v329
        %vm335 = vcmask 261120
        %v337 = vsel %vm335, %v314, 0
        %339 = vmatpush.bf16.msra.mxu0 0
        %340 = vmatpush.bf16.msra.mxu0 0
        %341 = vmatpush.bf16.msra.mxu0 0
        %342 = vmatpush.bf16.msra.mxu0 0
        %343 = vmatpush.bf16.msra.mxu0 0
        %344 = vmatpush.bf16.msra.mxu0 0
        %345 = vmatpush.bf16.msra.mxu0 %v332
        %346 = vmatpush.bf16.msra.mxu0 %v331
        %347 = vmatmul.bf16.gmra.mxu0 %v337
        %v348 = vpop.f32.mrf.mxu0
        %v349 = vadd.f32 %v321, %v348
        %v350 = vpop.f32.mrf.mxu0
        %351 = vdwg.mxu0
        %v352 = vpack.c.bf16 %v349, %v349
        %v354 = vunpack.c.l.b16 %v352
        %v355 = vpack.c.b16 %v354, %v354
        %356 = vrot.lane.b32.xlu0 %v355, 96
        %v357 = vpop.permute.xlu0 %356
        %vm358 = vcmask 64512
        %v360 = vsel %vm358, %v352, 0
        %v363 = vsel %vm358, %v357, 0
        %365 = vmatpush.bf16.xpose.msra.mxu0 0
        %366 = vmatpush.bf16.xpose.msra.mxu0 0
        %367 = vmatpush.bf16.xpose.msra.mxu0 0
        %368 = vmatpush.bf16.xpose.msra.mxu0 0
        %369 = vmatpush.bf16.xpose.msra.mxu0 0
        %370 = vmatpush.bf16.xpose.msra.mxu0 0
        %371 = vmatpush.bf16.xpose.msra.mxu0 0
        %372 = vmatpush.bf16.xpose.msra.mxu0 %v363
        %373 = vmatmul.bf16.gmra.mxu0 %v360
        %v374 = vpop.f32.mrf.mxu0
        %v375 = vadd.f32 0.0, %v374
        %v376 = vpop.f32.mrf.mxu0
        %377 = vdwg.mxu0
        %v378 = vsel %vm358, %v375, -inf
        %379 = vmax.xlane.f32.xlu0 %v378
        %v380 = vpop.xlane.xlu0 %379
        %v381 = vsub.f32 %v375, %v380
        %v382 = vmul.f32 %v381, 1.442695
        %v383 = vpow.pop %v382
        %v384 = vsel %vm358, %v383, 0.0
        %385 = vadd.xlane.f32.xlu0 %v384
        %v386 = vpop.xlane.xlu0 %385
        %v387 = vrcp.pop %v386
        %v388 = vmul.f32 %v386, %v387
        %v389 = vsub.f32 2.0, %v388
        %v390 = vmul.f32 %v387, %v389
        %v391 = vmul.f32 %v383, %v390
        %v392 = vpack.c.bf16 %v391, %v391
        %393 = vrot.lane.b32.xlu0 %v355, 64
        %v394 = vpop.permute.xlu0 %393
        %v396 = vsel %vm358, %v392, 0
        %vm398 = vcmask 1043456
        %v400 = vsel %vm398, %v394, 0
        %402 = vmatpush.bf16.msra.mxu0 0
        %403 = vmatpush.bf16.msra.mxu0 0
        %404 = vmatpush.bf16.msra.mxu0 0
        %405 = vmatpush.bf16.msra.mxu0 0
        %406 = vmatpush.bf16.msra.mxu0 0
        %407 = vmatpush.bf16.msra.mxu0 0
        %408 = vmatpush.bf16.msra.mxu0 0
        %409 = vmatpush.bf16.msra.mxu0 %v400
        %410 = vmatmul.bf16.gmra.mxu0 %v396
        %v411 = vpop.f32.mrf.mxu0
        %v412 = vadd.f32 0.0, %v411
        %v413 = vpop.f32.mrf.mxu0
        %414 = vdwg.mxu0
        %v415 = vpack.c.bf16 %v412, %v412
        %vm416 = vcmask 60416
        %417 = vst.msk [vmem:[#allocation2] sm:$0xf] %vm416, %v415
        %418 = vrot.lane.b32.xlu0 %v355, 120
        %v419 = vpop.permute.xlu0 %418
        %420 = vrot.lane.b32.xlu0 %v355, 88
        %v421 = vpop.permute.xlu0 %420
        %v423 = vsel %vm358, %v419, 0
        %v426 = vsel %vm358, %v421, 0
        %428 = vmatpush.bf16.xpose.msra.mxu0 0
        %429 = vmatpush.bf16.xpose.msra.mxu0 0
        %430 = vmatpush.bf16.xpose.msra.mxu0 0
        %431 = vmatpush.bf16.xpose.msra.mxu0 0
        %432 = vmatpush.bf16.xpose.msra.mxu0 0
        %433 = vmatpush.bf16.xpose.msra.mxu0 0
        %434 = vmatpush.bf16.xpose.msra.mxu0 0
        %435 = vmatpush.bf16.xpose.msra.mxu0 %v426
        %436 = vmatmul.bf16.gmra.mxu0 %v423
        %v437 = vpop.f32.mrf.mxu0
        %v438 = vadd.f32 0.0, %v437
        %v439 = vpop.f32.mrf.mxu0
        %440 = vdwg.mxu0
        %v441 = vsel %vm358, %v438, -inf
        %442 = vmax.xlane.f32.xlu0 %v441
        %v443 = vpop.xlane.xlu0 %442
        %v444 = vsub.f32 %v438, %v443
        %v445 = vmul.f32 %v444, 1.442695
        %v446 = vpow.pop %v445
        %v447 = vsel %vm358, %v446, 0.0
        %448 = vadd.xlane.f32.xlu0 %v447
        %v449 = vpop.xlane.xlu0 %448
        %v450 = vrcp.pop %v449
        %v451 = vmul.f32 %v449, %v450
        %v452 = vsub.f32 2.0, %v451
        %v453 = vmul.f32 %v450, %v452
        %v454 = vmul.f32 %v446, %v453
        %v455 = vpack.c.bf16 %v454, %v454
        %456 = vrot.lane.b32.xlu0 %v355, 56
        %v457 = vpop.permute.xlu0 %456
        %v459 = vsel %vm358, %v455, 0
        %v462 = vsel %vm398, %v457, 0
        %464 = vmatpush.bf16.msra.mxu0 0
        %465 = vmatpush.bf16.msra.mxu0 0
        %466 = vmatpush.bf16.msra.mxu0 0
        %467 = vmatpush.bf16.msra.mxu0 0
        %468 = vmatpush.bf16.msra.mxu0 0
        %469 = vmatpush.bf16.msra.mxu0 0
        %470 = vmatpush.bf16.msra.mxu0 0
        %471 = vmatpush.bf16.msra.mxu0 %v462
        %472 = vmatmul.bf16.gmra.mxu0 %v459
        %v473 = vpop.f32.mrf.mxu0
        %v474 = vadd.f32 0.0, %v473
        %v475 = vpop.f32.mrf.mxu0
        %476 = vdwg.mxu0
        %v477 = vpack.c.bf16 %v474, %v474
        %479 = vrot.lane.b32.xlu0 %v477, 8
        %v480 = vpop.permute.xlu0 %479
        %vm482 = vcmask 126016
        %483 = vst.msk [vmem:[#allocation2] sm:$0xf] %vm482, %v480
        %v484 = vadd.f32 %v391, %v454
        %485 = vrot.lane.b32.xlu0 %v355, 112
        %v486 = vpop.permute.xlu0 %485
        %487 = vrot.lane.b32.xlu0 %v355, 80
        %v488 = vpop.permute.xlu0 %487
        %v490 = vsel %vm358, %v486, 0
        %v493 = vsel %vm358, %v488, 0
        %495 = vmatpush.bf16.xpose.msra.mxu0 0
        %496 = vmatpush.bf16.xpose.msra.mxu0 0
        %497 = vmatpush.bf16.xpose.msra.mxu0 0
        %498 = vmatpush.bf16.xpose.msra.mxu0 0
        %499 = vmatpush.bf16.xpose.msra.mxu0 0
        %500 = vmatpush.bf16.xpose.msra.mxu0 0
        %501 = vmatpush.bf16.xpose.msra.mxu0 0
        %502 = vmatpush.bf16.xpose.msra.mxu0 %v493
        %503 = vmatmul.bf16.gmra.mxu0 %v490
        %v504 = vpop.f32.mrf.mxu0
        %v505 = vadd.f32 0.0, %v504
        %v506 = vpop.f32.mrf.mxu0
        %507 = vdwg.mxu0
        %v508 = vsel %vm358, %v505, -inf
        %509 = vmax.xlane.f32.xlu0 %v508
        %v510 = vpop.xlane.xlu0 %509
        %v511 = vsub.f32 %v505, %v510
        %v512 = vmul.f32 %v511, 1.442695
        %v513 = vpow.pop %v512
        %v514 = vsel %vm358, %v513, 0.0
        %515 = vadd.xlane.f32.xlu0 %v514
        %v516 = vpop.xlane.xlu0 %515
        %v517 = vrcp.pop %v516
        %v518 = vmul.f32 %v516, %v517
        %v519 = vsub.f32 2.0, %v518
        %v520 = vmul.f32 %v517, %v519
        %v521 = vmul.f32 %v513, %v520
        %v522 = vpack.c.bf16 %v521, %v521
        %523 = vrot.lane.b32.xlu0 %v355, 48
        %v524 = vpop.permute.xlu0 %523
        %v526 = vsel %vm358, %v522, 0
        %v529 = vsel %vm398, %v524, 0
        %531 = vmatpush.bf16.msra.mxu0 0
        %532 = vmatpush.bf16.msra.mxu0 0
        %533 = vmatpush.bf16.msra.mxu0 0
        %534 = vmatpush.bf16.msra.mxu0 0
        %535 = vmatpush.bf16.msra.mxu0 0
        %536 = vmatpush.bf16.msra.mxu0 0
        %537 = vmatpush.bf16.msra.mxu0 0
        %538 = vmatpush.bf16.msra.mxu0 %v529
        %539 = vmatmul.bf16.gmra.mxu0 %v526
        %v540 = vpop.f32.mrf.mxu0
        %v541 = vadd.f32 0.0, %v540
        %v542 = vpop.f32.mrf.mxu0
        %543 = vdwg.mxu0
        %v544 = vpack.c.bf16 %v541, %v541
        %546 = vrot.lane.b32.xlu0 %v544, 16
        %v547 = vpop.permute.xlu0 %546
        %vm549 = vcmask 191616
        %550 = vst.msk [vmem:[#allocation2] sm:$0xf] %vm549, %v547
        %v551 = vadd.f32 %v484, %v521
        %552 = vrot.lane.b32.xlu0 %v355, 104
        %v553 = vpop.permute.xlu0 %552
        %554 = vrot.lane.b32.xlu0 %v355, 72
        %v555 = vpop.permute.xlu0 %554
        %v557 = vsel %vm358, %v553, 0
        %v560 = vsel %vm358, %v555, 0
        %562 = vmatpush.bf16.xpose.msra.mxu0 0
        %563 = vmatpush.bf16.xpose.msra.mxu0 0
        %564 = vmatpush.bf16.xpose.msra.mxu0 0
        %565 = vmatpush.bf16.xpose.msra.mxu0 0
        %566 = vmatpush.bf16.xpose.msra.mxu0 0
        %567 = vmatpush.bf16.xpose.msra.mxu0 0
        %568 = vmatpush.bf16.xpose.msra.mxu0 0
        %569 = vmatpush.bf16.xpose.msra.mxu0 %v560
        %570 = vmatmul.bf16.gmra.mxu0 %v557
        %v571 = vpop.f32.mrf.mxu0
        %v572 = vadd.f32 0.0, %v571
        %v573 = vpop.f32.mrf.mxu0
        %574 = vdwg.mxu0
        %v575 = vsel %vm358, %v572, -inf
        %576 = vmax.xlane.f32.xlu0 %v575
        %v577 = vpop.xlane.xlu0 %576
        %v578 = vsub.f32 %v572, %v577
        %v579 = vmul.f32 %v578, 1.442695
        %v580 = vpow.pop %v579
        %v581 = vsel %vm358, %v580, 0.0
        %582 = vadd.xlane.f32.xlu0 %v581
        %v583 = vpop.xlane.xlu0 %582
        %v584 = vrcp.pop %v583
        %v585 = vmul.f32 %v583, %v584
        %v586 = vsub.f32 2.0, %v585
        %v587 = vmul.f32 %v584, %v586
        %v588 = vmul.f32 %v580, %v587
        %v589 = vpack.c.bf16 %v588, %v588
        %590 = vrot.lane.b32.xlu0 %v355, 40
        %v591 = vpop.permute.xlu0 %590
        %v593 = vsel %vm358, %v589, 0
        %v596 = vsel %vm398, %v591, 0
        %598 = vmatpush.bf16.msra.mxu0 0
        %599 = vmatpush.bf16.msra.mxu0 0
        %600 = vmatpush.bf16.msra.mxu0 0
        %601 = vmatpush.bf16.msra.mxu0 0
        %602 = vmatpush.bf16.msra.mxu0 0
        %603 = vmatpush.bf16.msra.mxu0 0
        %604 = vmatpush.bf16.msra.mxu0 0
        %605 = vmatpush.bf16.msra.mxu0 %v596
        %606 = vmatmul.bf16.gmra.mxu0 %v593
        %v607 = vpop.f32.mrf.mxu0
        %v608 = vadd.f32 0.0, %v607
        %v609 = vpop.f32.mrf.mxu0
        %610 = vdwg.mxu0
        %v611 = vpack.c.bf16 %v608, %v608
        %613 = vrot.lane.b32.xlu0 %v611, 24
        %v614 = vpop.permute.xlu0 %613
        %vm616 = vcmask 257216
        %617 = vst.msk [vmem:[#allocation2] sm:$0xf] %vm616, %v614
        %v618 = vadd.f32 %v551, %v588
        %v619 = vld [vmem:[#allocation2] sm:$0xf]
        %v620 = vld [vmem:[#allocation8] sm:$0xf]
        %v621 = vld [vmem:[#allocation8 + $0x4] sm:$0xf]
        %v622 = vld [vmem:[#allocation8 + $0x8] sm:$0xf]
        %v623 = vld [vmem:[#allocation8 + $0xc] sm:$0xf]
        %v624 = vld [vmem:[%s4] sm:$0x1]
        %v626 = vperm.slane %v624, 0
        %v632 = vunpack.c.l.b16 %v620
        %v633 = vunpack.c.l.b16 %v621
        %v634 = vunpack.c.l.b16 %v622
        %v635 = vunpack.c.l.b16 %v623
        %v636 = vpack.c.b16 %v633, %v632
        %v637 = vpack.c.b16 %v635, %v634
        %v641 = vsel %vm335, %v619, 0
        %643 = vmatpush.bf16.msra.mxu0 0
        %644 = vmatpush.bf16.msra.mxu0 0
        %645 = vmatpush.bf16.msra.mxu0 0
        %646 = vmatpush.bf16.msra.mxu0 0
        %647 = vmatpush.bf16.msra.mxu0 0
        %648 = vmatpush.bf16.msra.mxu0 0
        %649 = vmatpush.bf16.msra.mxu0 %v637
        %650 = vmatpush.bf16.msra.mxu0 %v636
        %651 = vmatmul.bf16.gmra.mxu0 %v641
        %v652 = vpop.f32.mrf.mxu0
        %v653 = vadd.f32 %v626, %v652
        %v654 = vpop.f32.mrf.mxu0
        %655 = vdwg.mxu0
        %656 = vst.msk [vmem:[%s305] sm:$0xff] %vm335, %v653
        %v657 = vmul.f32 %v618, 0.25
        %658 = vst.msk [vmem:[%s312] sm:$0xff] %vm358, %v657
        %s659 = sand.u32 %s146, 1
        %s660 = scalar_lea.sflag [#allocation5], %s659
        %s661 = sand.u32 %s146, 1
        %s662 = smul.addr %s661, 8
        %s663 = scalar_lea.vmem [#allocation9], %s662
        %s664 = sand.u32 %s172, 1
        %s665 = scalar_lea.sflag [#allocation11], %s664
        %s666 = sand.u32 %s172, 1
        %s667 = smul.addr %s666, 8
        %s668 = scalar_lea.vmem [#allocation10], %s667
        // Predicated region
        $region53: #{tpu_custom_call.1} parent=39 // pred_check
          %p669 = pneg %p156
        $region54: #{tpu_custom_call.1} parent=39 // pred_check_branch
          %671 = sbr.rel (%p669) target = $region56
        $region55: #{tpu_custom_call.1} parent=39 // pred_region
          %673 = vsyncadd %s660, 0
          %s674 = smul.addr %s28, 8
          %s675 = scalar_lea.hbm %s5, %s674
          %s677 = sshll.u32 %s663, 4
          %s678 = int_to_ptr.vmem [resolvable:$true] %s677
          %s679 = sshll.u32 %s675, 4
          %s680 = int_to_ptr.hbm [resolvable:$true] %s679
          %682 = dma.vmem_to_hbm [thread:$0]  %s678, 128, %s680, %s660
        $region56: #{tpu_custom_call.1} parent=39 // pred_fallthru
          _
        // Predicated region
        $region57: #{tpu_custom_call.1} parent=39 // pred_check
          %p683 = pneg %p182
        $region58: #{tpu_custom_call.1} parent=39 // pred_check_branch
          %685 = sbr.rel (%p683) target = $region60
        $region59: #{tpu_custom_call.1} parent=39 // pred_region
          %687 = vsyncadd %s665, 0
          %s688 = smul.addr %s28, 8
          %s689 = scalar_lea.hbm %s6, %s688
          %s691 = sshll.u32 %s668, 4
          %s692 = int_to_ptr.vmem [resolvable:$true] %s691
          %s693 = sshll.u32 %s689, 4
          %s694 = int_to_ptr.hbm [resolvable:$true] %s693
          %696 = dma.vmem_to_hbm [thread:$0]  %s692, 128, %s694, %s665
        $region60: #{tpu_custom_call.1} parent=39 // pred_fallthru
          _
      $region40: #{tpu_custom_call.1} parent=5 // pred_fallthru
        _
      %p697 = scmp.le.s32.totalorder 2, %s23
      // Predicated region
      $region61: #{tpu_custom_call.1} parent=5 // pred_check
        %p698 = pneg %p697
      $region62: #{tpu_custom_call.1} parent=5 // pred_check_branch
        %700 = sbr.rel (%p698) target = $region64
      $region63: #{tpu_custom_call.1} parent=5 // pred_region
        %s701 = ssub.s32 %s23, 2
        // Predicated region
        $region65: #{tpu_custom_call.1} parent=63 // pred_check
          %p702 = pneg %p162
        $region66: #{tpu_custom_call.1} parent=63 // pred_check_branch
          %704 = sbr.rel (%p702) target = $region68
        $region67: #{tpu_custom_call.1} parent=63 // pred_region
          %s705 = sand.u32 %s147, 1
          %s706 = scalar_lea.sflag [#allocation5], %s705
          %s707 = sand.u32 %s147, 1
          %s708 = smul.addr %s707, 8
          %s709 = scalar_lea.vmem [#allocation9], %s708
          %711 = dma.done %s706, 128
        $region68: #{tpu_custom_call.1} parent=63 // pred_fallthru
          _
        // Predicated region
        $region69: #{tpu_custom_call.1} parent=63 // pred_check
          %p712 = pneg %p188
        $region70: #{tpu_custom_call.1} parent=63 // pred_check_branch
          %714 = sbr.rel (%p712) target = $region72
        $region71: #{tpu_custom_call.1} parent=63 // pred_region
          %s715 = sand.u32 %s173, 1
          %s716 = scalar_lea.sflag [#allocation11], %s715
          %s717 = sand.u32 %s173, 1
          %s718 = smul.addr %s717, 8
          %s719 = scalar_lea.vmem [#allocation10], %s718
          %721 = dma.done %s716, 128
        $region72: #{tpu_custom_call.1} parent=63 // pred_fallthru
          _
      $region64: #{tpu_custom_call.1} parent=5 // pred_fallthru
        _
    $region6: #{tpu_custom_call.1} parent=1 // loop_footer
      %s27 = sadd.s32 1, %s23
    $region7: #{tpu_custom_call.1} parent=1 // loop_footer_branch
      %22 = sbr.rel target = $region3
    $region8: #{tpu_custom_call.1} parent=1 // loop_exit
      _
    %722 = vsyncpa [#allocation4], 1
    %s723 = scalar_lea.sflag [#allocation4], 1
    %724 = vsyncpa %s723, 1
    %725 = vsyncpa [#allocation7], 1
    %726 = vsyncpa [#allocation5], 1
    %s727 = scalar_lea.sflag [#allocation5], 1
    %728 = vsyncpa %s727, 1
    %729 = vsyncpa [#allocation11], 1
    %s730 = scalar_lea.sflag [#allocation11], 1
    %731 = vsyncpa %s730, 1

</llo_original>
